<compile_context>
chip_gen: v7x
topology: tpu7x:2x2x1
jax: 0.10.0
libtpu: 0.0.40
codegen_flags: <defaults>
</compile_context>

<pallas_src>
import jax
import jax.numpy as jnp
from jax.experimental import pallas as pl
from jax.experimental.pallas import tpu as pltpu

LANE = 128
ROW_ALIGN = 16  # keeps every slab sub-view start sublane-tile aligned for f32 & bf16


def _round_up(x, m):
    return ((x + m - 1) // m) * m


# ----------------------------------------------------------------------------
# Fused Pallas kernel: whole encoder forward in one call
# ----------------------------------------------------------------------------
def _make_fused_encoder_kernel(*, conditional, layer_specs, compute_dtype):
    """Kernel ref layout (positional): x_ref, [c_ref], params_ref, out_ref.

    `layer_specs` entries: (w_off, w_rows, wc_off, wc_rows, b_off, cols, relu)
    with wc_off == -1 for layers without a label-weight block.  All offsets are
    static Python ints -> static ref views, zero runtime cost.
    """
    def kernel(*refs):
        i = 0
        x_ref = refs[i]; i += 1
        if conditional:
            c_ref = refs[i]; i += 1
        p_ref = refs[i]; i += 1
        out_ref = refs[-1]

        h = x_ref[...]                                          # (Bt, D0) f32
        for (w_off, w_rows, wc_off, wc_rows, b_off, cols, relu) in layer_specs:
            b = p_ref[b_off:b_off + 1, 0:cols].astype(jnp.float32)   # (1, cols)
            w = p_ref[w_off:w_off + w_rows, 0:cols]
            y = jnp.dot(h.astype(compute_dtype), w,
                        preferred_element_type=jnp.float32)
            if wc_off >= 0:
                # one_hot(c) @ W0_c  ==  exact row gather of the label rows.
                w_c = p_ref[wc_off:wc_off + wc_rows, 0:cols]
                labels = c_ref[...]                             # (Bt, 1) int32
                iota = jax.lax.broadcasted_iota(
                    jnp.int32, (h.shape[0], wc_rows), 1)        # (Bt, L)
                onehot = (iota == labels).astype(compute_dtype)
                y = y + jnp.dot(onehot, w_c,
                                preferred_element_type=jnp.float32)
            y = y + b                                           # bias add in f32
            h = jnp.maximum(y, 0.0) if relu else y              # ReLU in f32

        out_ref[...] = h.astype(out_ref.dtype)

    return kernel


# ----------------------------------------------------------------------------
# Encoder module (packed-parameter container + single-pallas_call forward)
# ----------------------------------------------------------------------------
class EncoderPallas:
    def __init__(self, layer_sizes, latent_size, conditional, num_labels, key,
                 param_dtype=jnp.bfloat16):
        assert len(layer_sizes) >= 2, "need at least one MLP layer"
        self.conditional = bool(conditional)
        self.num_labels = int(num_labels)
        self.latent_size = int(latent_size)
        self.param_dtype = jnp.dtype(param_dtype)

        sizes = list(layer_sizes)
        self.x_size = int(sizes[0])                  # width of x alone
        if self.conditional:
            sizes[0] += self.num_labels              # same as the PyTorch module

        def init_linear(k, d_in, d_out):
            kw, kb = jax.random.split(k)
            bound = 1.0 / (d_in ** 0.5)              # PyTorch nn.Linear default init
            w = jax.random.uniform(kw, (d_in, d_out), jnp.float32, -bound, bound)
            b = jax.random.uniform(kb, (d_out,), jnp.float32, -bound, bound)
            return w, b

        # --- true (unpadded) layers: hidden linears (+ReLU) then fused heads.
        raw = []
        for d_in, d_out in zip(sizes[:-1], sizes[1:]):
            key, k = jax.random.split(key)
            w, b = init_linear(k, d_in, d_out)
            raw.append((w, b, True))
        key, k_m, k_v = jax.random.split(key, 3)
        w_m, b_m = init_linear(k_m, sizes[-1], latent_size)
        w_v, b_v = init_linear(k_v, sizes[-1], latent_size)
        raw.append((jnp.concatenate([w_m, w_v], axis=1),
                    jnp.concatenate([b_m, b_v], axis=0), False))  # heads: no ReLU

        # --- lane-pad every layer output to a multiple of 128 and pack all
        # parameters into ONE slab => a single rectangular unmasked DMA.
        out_pads = [max(LANE, _round_up(w.shape[1], LANE)) for (w, _, _) in raw]
        self.pad_col = max(out_pads)
        self.out_width = 2 * self.latent_size
        self.padded_out = out_pads[-1]               # zero-padded lanes are inert

        blocks = []
        self._row = 0

        def push(arr):                               # arr: (r, c) f32 true values
            r, c = arr.shape
            r_alloc = _round_up(r, ROW_ALIGN)
            buf = jnp.zeros((r_alloc, self.pad_col), jnp.float32)
            buf = buf.at[:r, :c].set(arr)
            blocks.append(buf)
            off = self._row
            self._row += r_alloc
            return off

        self.layer_specs = []
        in_dim = sizes[0]
        for li, ((w, b, relu), out_pad) in enumerate(zip(raw, out_pads)):
            if li == 0 and self.conditional:
                w_off = push(w[: self.x_size])                       # x rows
                wc_off = push(w[self.x_size:])                       # label rows
                w_rows, wc_rows = self.x_size, self.num_labels
            else:
                w_full = jnp.zeros((in_dim, w.shape[1]), jnp.float32)
                w_full = w_full.at[: w.shape[0], :].set(w)           # zero rows for pad
                w_off = push(w_full)
                w_rows, wc_off, wc_rows = in_dim, -1, 0
            b_off = push(b.reshape(1, -1))
            self.layer_specs.append(
                (w_off, w_rows, wc_off, wc_rows, b_off, out_pad, relu))
            in_dim = out_pad                      # next layer consumes padded h

        self.param_slab = jnp.concatenate(blocks, axis=0).astype(self.param_dtype)

        self._kernel = _make_fused_encoder_kernel(
            conditional=self.conditional,
            layer_specs=tuple(self.layer_specs),
            compute_dtype=self.param_dtype)

    # ------------------------------------------------------------------
    def __call__(self, x, c=None, *, split=True):
        x = jnp.asarray(x, jnp.float32)
        batch = x.shape[0]
        inputs = [x]
        if self.conditional:
            c = jnp.asarray(c)
            if c.dtype != jnp.int32:
                c = c.astype(jnp.int32)
            if c.ndim != 2 or c.shape != (batch, 1):     # callers should pass (B,1) int32
                c = c.reshape(batch, 1)
            inputs.append(c)
        inputs.append(self.param_slab)

        out_shape = jax.ShapeDtypeStruct((batch, self.padded_out), jnp.float32)

        # Advisory cost + explicit VMEM budget (v7x has only 64 MiB of VMEM).
        slab_bytes = self.param_slab.size * self.param_slab.dtype.itemsize
        io_bytes = (x.size * 4 + batch * self.padded_out * 4
                    + (batch * 4 if self.conditional else 0))
        flops = 0
        for (_, w_rows, _, wc_rows, _, cols, _) in self.layer_specs:
            flops += 2 * (w_rows + wc_rows) * cols
        flops *= batch
        cost = pl.CostEstimate(flops=flops, transcendentals=0,
                               bytes_accessed=slab_bytes + io_bytes)
        vmem_limit = int(min(max(4 * (slab_bytes + io_bytes) + (4 << 20),
                                 32 << 20), 64 << 20))

        # Batch grid only when it pays off (shards across v7x's 2 TensorCores;
        # 256-row tiles match the 256-wide MXU on v6e/v7x, 128 fits v5e too).
        tile_b = None
        for t in (256, 128):
            if batch % t == 0 and batch // t >= 2:
                tile_b = t
                break

        if tile_b is None:
            vmem = pl.BlockSpec(memory_space=pltpu.MemorySpace.VMEM)
            out = pl.pallas_call(
                self._kernel,
                out_shape=out_shape,
                in_specs=[vmem] * len(inputs),
                out_specs=vmem,
                cost_estimate=cost,
                compiler_params=pltpu.CompilerParams(
                    vmem_limit_bytes=vmem_limit),
            )(*inputs)
        else:
            in_specs = [pl.BlockSpec((tile_b, x.shape[1]), lambda i: (i, 0))]
            if self.conditional:
                in_specs.append(pl.BlockSpec((tile_b, 1), lambda i: (i, 0)))
            in_specs.append(
                pl.BlockSpec(self.param_slab.shape, lambda i: (0, 0)))  # resident
            out_specs = pl.BlockSpec((tile_b, self.padded_out), lambda i: (i, 0))
            out = pl.pallas_call(
                self._kernel,
                out_shape=out_shape,
                grid=(batch // tile_b,),
                in_specs=in_specs,
                out_specs=out_specs,
                cost_estimate=cost,
                compiler_params=pltpu.CompilerParams(
                    dimension_semantics=("parallel",),
                    vmem_limit_bytes=vmem_limit),
            )(*inputs)

        if not split:
            # Packed (B, padded_out): [:, :latent]=means, [:, latent:2*latent]=log_vars,
            # remaining lanes are exactly zero by construction.
            return out
        means = out[:, : self.latent_size]
        log_vars = out[:, self.latent_size: self.out_width]
        return means, log_vars


# ----------------------------------------------------------------------------
# Pure-JAX reference (mirrors the PyTorch forward, using the same packed params)
# ----------------------------------------------------------------------------
def reference_forward(enc, x, c=None):
    hp = jax.lax.Precision.HIGHEST
    slab = enc.param_slab.astype(jnp.float32)
    bf16 = enc.param_dtype == jnp.dtype(jnp.bfloat16)
    h = jnp.asarray(x, jnp.float32)
    onehot = None
    if enc.conditional:
        onehot = jax.nn.one_hot(jnp.asarray(c).reshape(-1), enc.num_labels,
                                dtype=jnp.float32)
    for (w_off, w_rows, wc_off, wc_rows, b_off, cols, relu) in enc.layer_specs:
        w = slab[w_off:w_off + w_rows, :cols]
        b = slab[b_off, :cols]
        hin = h.astype(jnp.bfloat16).astype(jnp.float32) if bf16 else h
        y = jnp.dot(hin, w, precision=hp)
        if wc_off >= 0:
            wc = slab[wc_off:wc_off + wc_rows, :cols]
            y = y + jnp.dot(onehot, wc, precision=hp)
        y = y + b
        h = jnp.maximum(y, 0.0) if relu else y
    return h[:, : enc.latent_size], h[:, enc.latent_size: enc.out_width]


if __name__ == "__main__":
    key = jax.random.PRNGKey(0)
    k1, k2, k3, kx1, kc1, kx2, kx3 = jax.random.split(key, 7)

    # 1) conditional encoder, f32 params -> tight numerical check (batch=8)
    enc_f32 = EncoderPallas([20, 32], latent_size=16, conditional=True,
                            num_labels=10, key=k1, param_dtype=jnp.float32)
    x1 = jax.random.normal(kx1, (8, 20), jnp.float32)
    c1 = jax.random.randint(kc1, (8, 1), 0, 10, dtype=jnp.int32)
    m1, v1 = enc_f32(x1, c1)
    jax.block_until_ready((m1, v1))
    rm1, rv1 = reference_forward(enc_f32, x1, c1)
    assert m1.shape == (8, 16) and v1.shape == (8, 16)
    assert jnp.allclose(m1, rm1, atol=1e-5, rtol=1e-5)
    assert jnp.allclose(v1, rv1, atol=1e-5, rtol=1e-5)

    # 2) conditional encoder, bf16 MXU operands (default fast path), batch=8
    enc_bf = EncoderPallas([20, 32], latent_size=16, conditional=True,
                           num_labels=10, key=k2, param_dtype=jnp.bfloat16)
    x2 = jax.random.normal(kx2, (8, 20), jnp.float32)
    m2, v2 = enc_bf(x2, c1)
    jax.block_until_ready((m2, v2))
    rm2, rv2 = reference_forward(enc_bf, x2, c1)
    assert jnp.allclose(m2, rm2, atol=2e-2, rtol=2e-2)
    assert jnp.allclose(v2, rv2, atol=2e-2, rtol=2e-2)

    # 3) unconditional deeper encoder, bf16, batch=256 -> exercises the
    #    batch-gridded "parallel" path (TILE_B=128, grid=(2,)).
    enc3 = EncoderPallas([24, 64, 32], latent_size=8, conditional=False,
                         num_labels=0, key=k3, param_dtype=jnp.bfloat16)
    x3 = jax.random.normal(kx3, (256, 24), jnp.float32)
    m3, v3 = enc3(x3)
    jax.block_until_ready((m3, v3))
    rm3, rv3 = reference_forward(enc3, x3)
    assert m3.shape == (256, 8) and v3.shape == (256, 8)
    assert jnp.allclose(m3, rm3, atol=2e-2, rtol=2e-2)
    assert jnp.allclose(v3, rv3, atol=2e-2, rtol=2e-2)

    print("KERNEL_OK")
</pallas_src>

<mosaic_0001>
module attributes {stable_mosaic.version = 11 : i64} {
  func.func @kernel(%arg0: memref<8x20xf32, #tpu.memory_space<vmem>>, %arg1: memref<8x1xi32, #tpu.memory_space<vmem>>, %arg2: memref<208x128xf32, #tpu.memory_space<vmem>>, %arg3: memref<8x128xf32, #tpu.memory_space<vmem>>) attributes {dimension_semantics = [], scalar_prefetch = 0 : i64, scratch_operands = 0 : i64, tpu.core_type = #tpu.core_type<tc>} {
    %c0 = arith.constant 0 : index
    %c0_0 = arith.constant 0 : index
    %0 = vector.load %arg0[%c0, %c0_0] : memref<8x20xf32, #tpu.memory_space<vmem>>, vector<8x20xf32>
    %c48 = arith.constant 48 : index
    %c0_1 = arith.constant 0 : index
    %1 = vector.load %arg2[%c48, %c0_1] : memref<208x128xf32, #tpu.memory_space<vmem>>, vector<1x128xf32>
    %c0_2 = arith.constant 0 : index
    %c0_3 = arith.constant 0 : index
    %2 = vector.load %arg2[%c0_2, %c0_3] : memref<208x128xf32, #tpu.memory_space<vmem>>, vector<20x128xf32>
    %cst = arith.constant dense<0.000000e+00> : vector<8x128xf32>
    %3 = tpu.matmul %0, %2, %cst {dimension_numbers = #tpu.dot_dimension_numbers<[1], [0], [0], [1], [0, 0, 1, 1], [], []>} : vector<8x20xf32>, vector<20x128xf32>, vector<8x128xf32> -> vector<8x128xf32>
    %c32 = arith.constant 32 : index
    %c0_4 = arith.constant 0 : index
    %4 = vector.load %arg2[%c32, %c0_4] : memref<208x128xf32, #tpu.memory_space<vmem>>, vector<10x128xf32>
    %c0_5 = arith.constant 0 : index
    %c0_6 = arith.constant 0 : index
    %5 = vector.load %arg1[%c0_5, %c0_6] : memref<8x1xi32, #tpu.memory_space<vmem>>, vector<8x1xi32>
    %6 = tpu.iota {dimensions = array<i32: 1>} : vector<8x10xi32>
    %7 = vector.broadcast %5 : vector<8x1xi32> to vector<8x10xi32>
    %8 = arith.cmpi eq, %6, %7 : vector<8x10xi32>
    %9 = arith.extui %8 : vector<8x10xi1> to vector<8x10xi32>
    %10 = arith.sitofp %9 : vector<8x10xi32> to vector<8x10xf32>
    %cst_7 = arith.constant dense<0.000000e+00> : vector<8x128xf32>
    %11 = tpu.matmul %10, %4, %cst_7 {dimension_numbers = #tpu.dot_dimension_numbers<[1], [0], [0], [1], [0, 0, 1, 1], [], []>} : vector<8x10xf32>, vector<10x128xf32>, vector<8x128xf32> -> vector<8x128xf32>
    %12 = arith.addf %3, %11 : vector<8x128xf32>
    %13 = vector.broadcast %1 : vector<1x128xf32> to vector<8x128xf32>
    %14 = arith.addf %12, %13 : vector<8x128xf32>
    %cst_8 = arith.constant 0.000000e+00 : f32
    %15 = vector.broadcast %cst_8 : f32 to vector<8x128xf32>
    %16 = arith.maximumf %14, %15 : vector<8x128xf32>
    %c192 = arith.constant 192 : index
    %c0_9 = arith.constant 0 : index
    %17 = vector.load %arg2[%c192, %c0_9] : memref<208x128xf32, #tpu.memory_space<vmem>>, vector<1x128xf32>
    %c64 = arith.constant 64 : index
    %c0_10 = arith.constant 0 : index
    %18 = vector.load %arg2[%c64, %c0_10] : memref<208x128xf32, #tpu.memory_space<vmem>>, vector<128x128xf32>
    %cst_11 = arith.constant dense<0.000000e+00> : vector<8x128xf32>
    %19 = tpu.matmul %16, %18, %cst_11 {dimension_numbers = #tpu.dot_dimension_numbers<[1], [0], [0], [1], [0, 0, 1, 1], [], []>} : vector<8x128xf32>, vector<128x128xf32>, vector<8x128xf32> -> vector<8x128xf32>
    %20 = vector.broadcast %17 : vector<1x128xf32> to vector<8x128xf32>
    %21 = arith.addf %19, %20 : vector<8x128xf32>
    %c0_12 = arith.constant 0 : index
    %c0_13 = arith.constant 0 : index
    %22 = vector.load %arg3[%c0_12, %c0_13] : memref<8x128xf32, #tpu.memory_space<vmem>>, vector<8x128xf32>
    tpu.vector_store %arg3[%c0_12, %c0_13], %21 {strides = array<i32>} : memref<8x128xf32, #tpu.memory_space<vmem>>, vector<8x128xf32>,
    return
  }
}

</mosaic_0001>

<llo_original>
// kernel: tpu_custom_call.1
$region0: #{tpu_custom_call.1}
  #allocation0 [shape = 'u32[]', space=smem, size = 0x4, offset = 0x4, fixed_abs, tag = 'smem constant byte address 0x4 - core index']
  #allocation1 [shape = 'u32[144,128]{1,0:T(1,128)}', space=vmem, size = 0x12000, scoped, tag = 'internal scratch']
  %s0 = inlined_call_operand.vmem [shape: f32[8,20], index: 0, kind: input, shape index: {}]
  %s1 = inlined_call_operand.vmem [shape: s32[8,1], index: 1, kind: input, shape index: {}]
  %s2 = inlined_call_operand.hbm [shape: f32[208,128], index: 2, kind: input, shape index: {}]
  %s3 = inlined_call_operand.hbm [shape: f32[8,128], index: 3, kind: output, shape index: {}]
  %s4 = sld [smem:[#allocation0]]
  $region26: #{tpu_custom_call.1} parent=0
    _
  %s6 = ssub.s32 1, %s4
  %s7 = scalar_select 0, %s6, %s4
  $region1: #{tpu_custom_call.1} parent=0
    #allocation2 [shape = 'u8[106496]{0}', space=vmem, size = 0x1a000, scoped, tag = 'input window, operand 2, single buffered']
    #allocation3 [shape = 's32[1]{0}', space=sflag, size = 0x4, scoped, tag = 'scoped memory for tpu_custom_call.1']
    #allocation4 [shape = 's32[1]{0}', space=sflag, size = 0x4, scoped, tag = 'scoped memory for tpu_custom_call.1']
    #allocation5 [shape = 'u8[4096]{0}', space=vmem, size = 0x1000, scoped, tag = 'output window, operand 0, single buffered']
    %8 = vsyncpa [#allocation3], 0
    %9 = vsyncpa [#allocation4], 0
    // Predicated region
    $region2: #{tpu_custom_call.1} parent=1 // pred_check
      _
    $region3: #{tpu_custom_call.1} parent=1 // pred_check_branch
      %11 = sbr.rel (0) target = $region5
    $region4: #{tpu_custom_call.1} parent=1 // pred_region
      _
    $region5: #{tpu_custom_call.1} parent=1 // pred_fallthru
      _
    // Predicated region
    $region6: #{tpu_custom_call.1} parent=1 // pred_check
      _
    $region7: #{tpu_custom_call.1} parent=1 // pred_check_branch
      %13 = sbr.rel (0) target = $region9
    $region8: #{tpu_custom_call.1} parent=1 // pred_region
      _
    $region9: #{tpu_custom_call.1} parent=1 // pred_fallthru
      _
    // Predicated region
    $region10: #{tpu_custom_call.1} parent=1 // pred_check
      _
    $region11: #{tpu_custom_call.1} parent=1 // pred_check_branch
      %15 = sbr.rel (0) target = $region13
    $region12: #{tpu_custom_call.1} parent=1 // pred_region
      %s17 = ssub.s32 3328, 3328
      %18 = vsyncadd [#allocation3], %s17
      %s19 = sshll.u32 [#allocation2], 4
      %s20 = int_to_ptr.vmem [resolvable:$true] %s19
      %25 = dma.hbm_to_vmem [thread:$0]  %s2, 3328, %s20, [#allocation3], 128, 128, 8
    $region13: #{tpu_custom_call.1} parent=1 // pred_fallthru
      _
    // Predicated region
    $region14: #{tpu_custom_call.1} parent=1 // pred_check
      _
    $region15: #{tpu_custom_call.1} parent=1 // pred_check_branch
      %27 = sbr.rel (0) target = $region17
    $region16: #{tpu_custom_call.1} parent=1 // pred_region
      %28 = dma.done [#allocation3], 3328
    $region17: #{tpu_custom_call.1} parent=1 // pred_fallthru
      _
    %v29 = vld [vmem:[%s0] sm:$0xff]
    %v30 = vld [vmem:[#allocation2 + $0x30] sm:$0x1]
    %v31 = vld [vmem:[#allocation2] sm:$0xff]
    %v32 = vld [vmem:[#allocation2 + $0x8] sm:$0xff]
    %v33 = vld [vmem:[#allocation2 + $0x10] sm:$0xf]
    %v34 = vld [vmem:[#allocation2 + $0x20] sm:$0xff]
    %v35 = vld [vmem:[#allocation2 + $0x28] sm:$0x3]
    %v36 = vld [vmem:[%s1] sm:$0xff]
    %v37 = vlaneseq
    %v38 = vand.u32 %v37, 127
    %39 = vset.pattern.permute.xlu0 0
    %40 = vperm.xlu0 %39, %v36
    %v41 = vpop.permute.xlu0 %40
    %vm42 = vcmp.eq.s32.totalorder %v38, %v41
    %v43 = vsel %vm42, 1, 0
    %v44 = vcvt.s32.f32 %v43
    %vm45 = vcmask 80896
    %v47 = vsel %vm45, %v44, 0
    %vm49 = vcmask 1041408
    %v51 = vsel %vm49, %v35, 0
    %53 = vmatprep.subr.mxu0 0.0
    %54 = vmatpush1.msra.mxu0 %v34
    %55 = vmatprep.subr.mxu0 0.0
    %56 = vmatpush1.msra.mxu0 %v51
    %57 = vmatprep.subr.mxu0 0.0
    %58 = vmatpush1.msra.mxu0 0.0
    %59 = vmatprep.subr.mxu0 0.0
    %60 = vmatpush1.msra.mxu0 0.0
    %61 = vmatprep.subr.mxu0 0.0
    %62 = vmatpush1.msra.mxu0 0.0
    %63 = vmatprep.subr.mxu0 0.0
    %64 = vmatpush1.msra.mxu0 0.0
    %65 = vmatprep.subr.mxu0 0.0
    %66 = vmatpush1.msra.mxu0 0.0
    %67 = vmatprep.subr.mxu0 0.0
    %68 = vmatpush1.msra.mxu0 0.0
    %69 = vmatprep.subr.mxu0 0.0
    %70 = vmatpush1.msra.mxu0 0.0
    %71 = vmatprep.subr.mxu0 0.0
    %72 = vmatpush1.msra.mxu0 0.0
    %73 = vmatprep.subr.mxu0 0.0
    %74 = vmatpush1.msra.mxu0 0.0
    %75 = vmatprep.subr.mxu0 0.0
    %76 = vmatpush1.msra.mxu0 0.0
    %77 = vmatprep.subr.mxu0 0.0
    %78 = vmatpush1.msra.mxu0 0.0
    %79 = vmatprep.subr.mxu0 0.0
    %80 = vmatpush1.msra.mxu0 0.0
    %81 = vmatprep.subr.mxu0 0.0
    %82 = vmatpush1.msra.mxu0 0.0
    %83 = vmatprep.subr.mxu0 0.0
    %84 = vmatpush1.msra.mxu0 0.0
    %85 = vmatprep.subr.mxu0 0.0
    %86 = vmatpush1.msra.mxu0 0.0
    %87 = vmatprep.subr.mxu0 0.0
    %88 = vmatpush1.msra.mxu0 0.0
    %89 = vmatprep.subr.mxu0 0.0
    %90 = vmatpush1.msra.mxu0 0.0
    %91 = vmatprep.subr.mxu0 0.0
    %92 = vmatpush1.msra.mxu0 0.0
    %93 = vmatprep.subr.mxu0 0.0
    %94 = vmatpush1.msra.mxu0 0.0
    %95 = vmatprep.subr.mxu0 0.0
    %96 = vmatpush1.msra.mxu0 0.0
    %97 = vmatprep.subr.mxu0 0.0
    %98 = vmatpush1.msra.mxu0 0.0
    %99 = vmatprep.subr.mxu0 0.0
    %100 = vmatpush1.msra.mxu0 0.0
    %101 = vmatprep.subr.mxu0 0.0
    %102 = vmatpush1.msra.mxu0 0.0
    %103 = vmatprep.subr.mxu0 0.0
    %104 = vmatpush1.msra.mxu0 0.0
    %105 = vmatprep.subr.mxu0 0.0
    %106 = vmatpush1.msra.mxu0 0.0
    %107 = vmatprep.subr.mxu0 0.0
    %108 = vmatpush1.msra.mxu0 0.0
    %109 = vmatprep.subr.mxu0 0.0
    %110 = vmatpush1.msra.mxu0 0.0
    %111 = vmatprep.subr.mxu0 0.0
    %112 = vmatpush1.msra.mxu0 0.0
    %113 = vmatprep.subr.mxu0 0.0
    %114 = vmatpush1.msra.mxu0 0.0
    %115 = vmatprep.subr.mxu0 0.0
    %116 = vmatpush1.msra.mxu0 0.0
    %117 = vmatprep.mubr.f32.mxu0 0.0
    %118 = vmatmul.mubr.f32.gmra.mrb[0].mxu0 %v47
    %v119 = vpop.f32.mrb[0].mxu0
    %v120 = vadd.f32 0.0, %v119
    %v121 = vpop.f32.mrb[0].mxu0
    %122 = vdwg.mxu0
    %vm123 = vcmask 162816
    %v125 = vsel %vm123, %v29, 0
    %vm127 = vcmask 1043456
    %v129 = vsel %vm127, %v33, 0
    %131 = vmatprep.subr.mxu0 0.0
    %132 = vmatpush1.msra.mxu0 %v31
    %133 = vmatprep.subr.mxu0 0.0
    %134 = vmatpush1.msra.mxu0 %v32
    %135 = vmatprep.subr.mxu0 0.0
    %136 = vmatpush1.msra.mxu0 %v129
    %137 = vmatprep.subr.mxu0 0.0
    %138 = vmatpush1.msra.mxu0 0.0
    %139 = vmatprep.subr.mxu0 0.0
    %140 = vmatpush1.msra.mxu0 0.0
    %141 = vmatprep.subr.mxu0 0.0
    %142 = vmatpush1.msra.mxu0 0.0
    %143 = vmatprep.subr.mxu0 0.0
    %144 = vmatpush1.msra.mxu0 0.0
    %145 = vmatprep.subr.mxu0 0.0
    %146 = vmatpush1.msra.mxu0 0.0
    %147 = vmatprep.subr.mxu0 0.0
    %148 = vmatpush1.msra.mxu0 0.0
    %149 = vmatprep.subr.mxu0 0.0
    %150 = vmatpush1.msra.mxu0 0.0
    %151 = vmatprep.subr.mxu0 0.0
    %152 = vmatpush1.msra.mxu0 0.0
    %153 = vmatprep.subr.mxu0 0.0
    %154 = vmatpush1.msra.mxu0 0.0
    %155 = vmatprep.subr.mxu0 0.0
    %156 = vmatpush1.msra.mxu0 0.0
    %157 = vmatprep.subr.mxu0 0.0
    %158 = vmatpush1.msra.mxu0 0.0
    %159 = vmatprep.subr.mxu0 0.0
    %160 = vmatpush1.msra.mxu0 0.0
    %161 = vmatprep.subr.mxu0 0.0
    %162 = vmatpush1.msra.mxu0 0.0
    %163 = vmatprep.subr.mxu0 0.0
    %164 = vmatpush1.msra.mxu0 0.0
    %165 = vmatprep.subr.mxu0 0.0
    %166 = vmatpush1.msra.mxu0 0.0
    %167 = vmatprep.subr.mxu0 0.0
    %168 = vmatpush1.msra.mxu0 0.0
    %169 = vmatprep.subr.mxu0 0.0
    %170 = vmatpush1.msra.mxu0 0.0
    %171 = vmatprep.subr.mxu0 0.0
    %172 = vmatpush1.msra.mxu0 0.0
    %173 = vmatprep.subr.mxu0 0.0
    %174 = vmatpush1.msra.mxu0 0.0
    %175 = vmatprep.subr.mxu0 0.0
    %176 = vmatpush1.msra.mxu0 0.0
    %177 = vmatprep.subr.mxu0 0.0
    %178 = vmatpush1.msra.mxu0 0.0
    %179 = vmatprep.subr.mxu0 0.0
    %180 = vmatpush1.msra.mxu0 0.0
    %181 = vmatprep.subr.mxu0 0.0
    %182 = vmatpush1.msra.mxu0 0.0
    %183 = vmatprep.subr.mxu0 0.0
    %184 = vmatpush1.msra.mxu0 0.0
    %185 = vmatprep.subr.mxu0 0.0
    %186 = vmatpush1.msra.mxu0 0.0
    %187 = vmatprep.subr.mxu0 0.0
    %188 = vmatpush1.msra.mxu0 0.0
    %189 = vmatprep.subr.mxu0 0.0
    %190 = vmatpush1.msra.mxu0 0.0
    %191 = vmatprep.subr.mxu0 0.0
    %192 = vmatpush1.msra.mxu0 0.0
    %193 = vmatprep.subr.mxu0 0.0
    %194 = vmatpush1.msra.mxu0 0.0
    %195 = vmatprep.mubr.f32.mxu0 0.0
    %196 = vmatmul.mubr.f32.gmra.mrb[0].mxu0 %v125
    %v197 = vpop.f32.mrb[0].mxu0
    %v198 = vadd.f32 %v120, %v197
    %v199 = vpop.f32.mrb[0].mxu0
    %200 = vdwg.mxu0
    %v201 = vlaneseq
    %v202 = vshrl.u32 %v201, 7
    %v203 = vsub.s32 0, %v202
    %v204 = vrot.slane %v30, %v203
    %v205 = vadd.f32 %v198, %v204
    %v206 = vmax.f32 %v205, 0.0
    %v207 = vld [vmem:[#allocation2 + $0xc0] sm:$0x1]
    %v208 = vld [vmem:[#allocation2 + $0x40] sm:$0xff]
    %v209 = vld [vmem:[#allocation2 + $0x48] sm:$0xff]
    %v210 = vld [vmem:[#allocation2 + $0x50] sm:$0xff]
    %v211 = vld [vmem:[#allocation2 + $0x58] sm:$0xff]
    %v212 = vld [vmem:[#allocation2 + $0x60] sm:$0xff]
    %v213 = vld [vmem:[#allocation2 + $0x68] sm:$0xff]
    %v214 = vld [vmem:[#allocation2 + $0x70] sm:$0xff]
    %v215 = vld [vmem:[#allocation2 + $0x78] sm:$0xff]
    %v216 = vld [vmem:[#allocation2 + $0x80] sm:$0xff]
    %v217 = vld [vmem:[#allocation2 + $0x88] sm:$0xff]
    %v218 = vld [vmem:[#allocation2 + $0x90] sm:$0xff]
    %v219 = vld [vmem:[#allocation2 + $0x98] sm:$0xff]
    %v220 = vld [vmem:[#allocation2 + $0xa0] sm:$0xff]
    %v221 = vld [vmem:[#allocation2 + $0xa8] sm:$0xff]
    %v222 = vld [vmem:[#allocation2 + $0xb0] sm:$0xff]
    %v223 = vld [vmem:[#allocation2 + $0xb8] sm:$0xff]
    %v224 = vlaneseq
    %v225 = vshrl.u32 %v224, 7
    %v226 = vsub.s32 0, %v225
    %v227 = vrot.slane %v207, %v226
    %228 = vmatprep.subr.mxu0 0.0
    %229 = vmatpush1.msra.mxu0 %v208
    %230 = vmatprep.subr.mxu0 0.0
    %231 = vmatpush1.msra.mxu0 %v209
    %232 = vmatprep.subr.mxu0 0.0
    %233 = vmatpush1.msra.mxu0 %v210
    %234 = vmatprep.subr.mxu0 0.0
    %235 = vmatpush1.msra.mxu0 %v211
    %236 = vmatprep.subr.mxu0 0.0
    %237 = vmatpush1.msra.mxu0 %v212
    %238 = vmatprep.subr.mxu0 0.0
    %239 = vmatpush1.msra.mxu0 %v213
    %240 = vmatprep.subr.mxu0 0.0
    %241 = vmatpush1.msra.mxu0 %v214
    %242 = vmatprep.subr.mxu0 0.0
    %243 = vmatpush1.msra.mxu0 %v215
    %244 = vmatprep.subr.mxu0 0.0
    %245 = vmatpush1.msra.mxu0 %v216
    %246 = vmatprep.subr.mxu0 0.0
    %247 = vmatpush1.msra.mxu0 %v217
    %248 = vmatprep.subr.mxu0 0.0
    %249 = vmatpush1.msra.mxu0 %v218
    %250 = vmatprep.subr.mxu0 0.0
    %251 = vmatpush1.msra.mxu0 %v219
    %252 = vmatprep.subr.mxu0 0.0
    %253 = vmatpush1.msra.mxu0 %v220
    %254 = vmatprep.subr.mxu0 0.0
    %255 = vmatpush1.msra.mxu0 %v221
    %256 = vmatprep.subr.mxu0 0.0
    %257 = vmatpush1.msra.mxu0 %v222
    %258 = vmatprep.subr.mxu0 0.0
    %259 = vmatpush1.msra.mxu0 %v223
    %260 = vmatprep.subr.mxu0 0.0
    %261 = vmatpush1.msra.mxu0 0.0
    %262 = vmatprep.subr.mxu0 0.0
    %263 = vmatpush1.msra.mxu0 0.0
    %264 = vmatprep.subr.mxu0 0.0
    %265 = vmatpush1.msra.mxu0 0.0
    %266 = vmatprep.subr.mxu0 0.0
    %267 = vmatpush1.msra.mxu0 0.0
    %268 = vmatprep.subr.mxu0 0.0
    %269 = vmatpush1.msra.mxu0 0.0
    %270 = vmatprep.subr.mxu0 0.0
    %271 = vmatpush1.msra.mxu0 0.0
    %272 = vmatprep.subr.mxu0 0.0
    %273 = vmatpush1.msra.mxu0 0.0
    %274 = vmatprep.subr.mxu0 0.0
    %275 = vmatpush1.msra.mxu0 0.0
    %276 = vmatprep.subr.mxu0 0.0
    %277 = vmatpush1.msra.mxu0 0.0
    %278 = vmatprep.subr.mxu0 0.0
    %279 = vmatpush1.msra.mxu0 0.0
    %280 = vmatprep.subr.mxu0 0.0
    %281 = vmatpush1.msra.mxu0 0.0
    %282 = vmatprep.subr.mxu0 0.0
    %283 = vmatpush1.msra.mxu0 0.0
    %284 = vmatprep.subr.mxu0 0.0
    %285 = vmatpush1.msra.mxu0 0.0
    %286 = vmatprep.subr.mxu0 0.0
    %287 = vmatpush1.msra.mxu0 0.0
    %288 = vmatprep.subr.mxu0 0.0
    %289 = vmatpush1.msra.mxu0 0.0
    %290 = vmatprep.subr.mxu0 0.0
    %291 = vmatpush1.msra.mxu0 0.0
    %292 = vmatprep.mubr.f32.mxu0 0.0
    %293 = vmatmul.mubr.f32.gmra.mrb[0].mxu0 %v206
    %v294 = vpop.f32.mrb[0].mxu0
    %v295 = vadd.f32 %v227, %v294
    %v296 = vpop.f32.mrb[0].mxu0
    %297 = vdwg.mxu0
    %298 = vst [vmem:[#allocation5] sm:$0xff] %v295
    // Predicated region
    $region18: #{tpu_custom_call.1} parent=1 // pred_check
      _
    $region19: #{tpu_custom_call.1} parent=1 // pred_check_branch
      %300 = sbr.rel (0) target = $region21
    $region20: #{tpu_custom_call.1} parent=1 // pred_region
      %s302 = ssub.s32 128, 128
      %303 = vsyncadd [#allocation4], %s302
      %s305 = sshll.u32 [#allocation5], 4
      %s306 = int_to_ptr.vmem [resolvable:$true] %s305
      %308 = dma.vmem_to_hbm [thread:$0]  %s306, 128, %s3, [#allocation4]
    $region21: #{tpu_custom_call.1} parent=1 // pred_fallthru
      _
    // Predicated region
    $region22: #{tpu_custom_call.1} parent=1 // pred_check
      _
    $region23: #{tpu_custom_call.1} parent=1 // pred_check_branch
      %310 = sbr.rel (0) target = $region25
    $region24: #{tpu_custom_call.1} parent=1 // pred_region
      %311 = dma.done [#allocation4], 128
    $region25: #{tpu_custom_call.1} parent=1 // pred_fallthru
      _
    %312 = vsyncpa [#allocation3], 1
    %313 = vsyncpa [#allocation4], 1

</llo_original>
